<compile_context>
chip_gen: v5e
topology: v5e:2x2
jax: 0.10.0
libtpu: 0.0.40
codegen_flags: <defaults>
</compile_context>

<pallas_src>
import inspect

import jax
import jax.numpy as jnp
from jax import lax
from jax.experimental import pallas as pl
from jax.experimental.pallas import tpu as pltpu

LN_EPS = 1e-5      # PyTorch nn.LayerNorm default eps
_MAX_TM = 1024     # row-tile ceiling (tile 512/1024 already ~85% of HBM roofline)


# --------------------------------------------------------------------------- #
# Kernels
# --------------------------------------------------------------------------- #
def residual_block_kernel(x_ref, wt_ref, params_ref, o_ref):
    """Full-weight path: one grid axis over row tiles; weight resident in VMEM.

    x_ref:      (TM, H) input row tile (native dtype)
    wt_ref:     (H, H)  pre-transposed linear weight (in, out)
    params_ref: (3, H)  f32: row 0 = bias, row 1 = LN gamma, row 2 = LN beta
    o_ref:      (TM, H) output tile
    """
    x_val = x_ref[...]
    lhs = x_val if x_val.dtype == wt_ref.dtype else x_val.astype(wt_ref.dtype)
    # Linear on the MXU: native-dtype operands, f32 accumulate.
    y = jnp.dot(lhs, wt_ref[...], preferred_element_type=jnp.float32)

    params = params_ref[...]                      # (3, H), already f32
    y = y + params[0:1, :]                        # + linear bias

    # LayerNorm over features: two independent reductions (can overlap on the
    # XLUs); biased variance = E[y^2] - mean^2 (PyTorch semantics), all f32.
    mean = jnp.mean(y, axis=-1, keepdims=True)
    mean_sq = jnp.mean(y * y, axis=-1, keepdims=True)
    var = mean_sq - mean * mean
    y = (y - mean) * lax.rsqrt(var + LN_EPS)
    y = y * params[1:2, :] + params[2:3, :]       # * gamma + beta

    y = jnp.maximum(y, 0.0)                                   # ReLU
    out = jnp.maximum(x_val.astype(jnp.float32) + y, 0.0)     # residual + ReLU
    o_ref[...] = out.astype(o_ref.dtype)


def residual_block_ktiled_kernel(xk_ref, wt_ref, params_ref, xfull_ref, o_ref, acc_ref):
    """K-tiled path for large H: grid (row_tiles, K_tiles), K last ("arbitrary").

    xk_ref:     (TM, TK) K-slice of x (matmul lhs)
    wt_ref:     (TK, H)  K-slice of the pre-transposed weight (streamed)
    params_ref: (3, H)   f32 bias / gamma / beta
    xfull_ref:  (TM, H)  full x row tile for the residual add (block index fixed over K)
    o_ref:      (TM, H)  output tile (written only in the finalize step)
    acc_ref:    (TM, H)  f32 accumulator scratch
    """
    k = pl.program_id(1)

    @pl.when(k == 0)
    def _init():
        acc_ref[...] = jnp.zeros_like(acc_ref)

    xk = xk_ref[...]
    lhs = xk if xk.dtype == wt_ref.dtype else xk.astype(wt_ref.dtype)
    acc_ref[...] += jnp.dot(lhs, wt_ref[...], preferred_element_type=jnp.float32)

    @pl.when(k == pl.num_programs(1) - 1)
    def _finalize():
        params = params_ref[...]                  # (3, H) f32
        y = acc_ref[...] + params[0:1, :]
        mean = jnp.mean(y, axis=-1, keepdims=True)
        mean_sq = jnp.mean(y * y, axis=-1, keepdims=True)
        var = mean_sq - mean * mean
        y = (y - mean) * lax.rsqrt(var + LN_EPS)
        y = y * params[1:2, :] + params[2:3, :]
        y = jnp.maximum(y, 0.0)
        out = jnp.maximum(xfull_ref[...].astype(jnp.float32) + y, 0.0)
        o_ref[...] = out.astype(o_ref.dtype)


# --------------------------------------------------------------------------- #
# Sizing helpers
# --------------------------------------------------------------------------- #
def _round_up(v, m):
    return -(-v // m) * m


def _cdiv(a, b):
    return -(-a // b)


def _supports_single_buffering() -> bool:
    if not hasattr(pl, "Buffered"):
        return False
    try:
        return "pipeline_mode" in inspect.signature(pl.BlockSpec).parameters
    except (TypeError, ValueError):
        return True


_HAS_PIPELINE_MODE = _supports_single_buffering()


def _vmem_budget_bytes() -> int:
    """Per-core VMEM budget with ~20% headroom for compiler scratch/semaphores."""
    try:
        cap = int(pltpu.get_tpu_info().vmem_capacity_bytes)
    except Exception:
        cap = 64 * 1024 * 1024   # conservative fallback: v7x per-TensorCore VMEM
    return (cap * 13) // 16      # ~81%: ~52 MiB on v7x, ~104 MiB on v5e/v6e


def _choose_tm(m: int, tm_cap: int) -> int:
    """Row tile: as big as the budget allows, multiple of 8, and an even number
    of grid steps when possible so v7x's 2 TensorCores split the work evenly."""
    m_pad = _round_up(max(m, 1), 8)
    cap = max(8, min((int(tm_cap) // 8) * 8, m_pad, _MAX_TM))
    steps = _cdiv(m_pad, cap)
    if m_pad > 8:
        steps = max(steps, 2)
        if steps % 2:
            steps += 1           # even step count -> balanced megacore split
    tm = _round_up(_cdiv(m_pad, steps), 8)
    return max(8, min(tm, cap))


def _pick_tk(h: int):
    """K-tile for the streamed-weight path: multiples of 256 feed the v6e/v7x
    256-wide MXU (512/256 also satisfy v5e's 128); None if H has no clean tile."""
    for tk in (512, 256, 128):
        if h % tk == 0 and h > tk:
            return tk
    return None


def _small_fixed_bytes(h, w_itemsize, weight_bufs, params_bufs):
    return weight_bufs * h * h * w_itemsize + params_bufs * 3 * h * 4


def _small_row_bytes(h, x_itemsize, o_itemsize):
    # per tm row: double-buffered x & out tiles + ~2 f32 body temps
    return h * (2 * x_itemsize + 2 * o_itemsize + 2 * 4)


def _ktile_fixed_bytes(h, tk, w_itemsize, params_bufs):
    return 2 * tk * h * w_itemsize + params_bufs * 3 * h * 4


def _ktile_row_bytes(h, tk, x_itemsize, o_itemsize):
    # x K-tiles (2 bufs) + full-row x (2) + out (2) + f32 acc scratch + ~2 f32 temps
    return 2 * tk * x_itemsize + h * (2 * x_itemsize + 2 * o_itemsize + 4 + 2 * 4)


# --------------------------------------------------------------------------- #
# Wrapper
# --------------------------------------------------------------------------- #
def prepare_residual_block_params(weight, bias, gamma, beta, *, compute_dtype=None):
    """One-time parameter packing (call at init, NOT per forward):
      * transpose the PyTorch (out, in) weight to (in, out) so the kernel
        computes x @ wt directly on the MXU,
      * pack bias / LN gamma / LN beta into a single f32 (3, H) operand.
    compute_dtype (e.g. jnp.bfloat16) optionally down-casts the weight for
    higher MXU throughput / half the weight DMA, at an accuracy cost.
    """
    wt = jnp.asarray(weight).T
    if compute_dtype is not None:
        wt = wt.astype(compute_dtype)
    params = jnp.stack(
        [
            jnp.asarray(bias, jnp.float32),
            jnp.asarray(gamma, jnp.float32),
            jnp.asarray(beta, jnp.float32),
        ],
        axis=0,
    )
    return wt, params


def _residual_block_2d(x, wt, params, *, single_buffer, force_ktile=False, tm=None, tk=None):
    M, H = x.shape
    assert wt.shape == (H, H), f"weight shape {wt.shape} != ({H}, {H})"
    assert params.shape == (3, H), f"params shape {params.shape} != (3, {H})"

    xb = jnp.dtype(x.dtype).itemsize
    wb = jnp.dtype(wt.dtype).itemsize
    ob = xb  # output dtype == input dtype

    budget = _vmem_budget_bytes()
    budget_eff = int(budget / 1.15)          # extra headroom inside the budget

    wbufs = 1 if single_buffer else 2
    pbufs = 1 if single_buffer else 2

    def invariant(shape, index_map):
        """BlockSpec for a grid-invariant operand: single-buffered when supported."""
        if single_buffer:
            return pl.BlockSpec(shape, index_map, pipeline_mode=pl.Buffered(1))
        return pl.BlockSpec(shape, index_map)

    tk_sel = tk if tk is not None else _pick_tk(H)
    small_fixed = _small_fixed_bytes(H, wb, wbufs, pbufs)
    small_row = _small_row_bytes(H, xb, ob)
    small_fits = small_fixed + 8 * small_row <= budget_eff
    use_ktile = (force_ktile or not small_fits) and tk_sel is not None

    if not use_ktile:
        # ----- full-weight path: weight resident, grid over row tiles only -----
        tm_cap = (budget_eff - small_fixed) // small_row if small_fits else 8
        tm_sel = tm if tm is not None else _choose_tm(M, tm_cap)
        est = small_fixed + tm_sel * small_row
        vmem_limit = int(min(budget, max(32 * 1024 * 1024, int(est * 1.2) + (2 << 20))))

        return pl.pallas_call(
            residual_block_kernel,
            out_shape=jax.ShapeDtypeStruct((M, H), x.dtype),
            grid_spec=pltpu.PrefetchScalarGridSpec(
                num_scalar_prefetch=0,
                grid=(pl.cdiv(M, tm_sel),),
                in_specs=[
                    pl.BlockSpec((tm_sel, H), lambda i: (i, 0)),   # x row tile
                    invariant((H, H), lambda i: (0, 0)),           # full weight (invariant)
                    invariant((3, H), lambda i: (0, 0)),           # packed bias/gamma/beta
                ],
                out_specs=pl.BlockSpec((tm_sel, H), lambda i: (i, 0)),
            ),
            compiler_params=pltpu.CompilerParams(
                dimension_semantics=("parallel",),
                vmem_limit_bytes=vmem_limit,
            ),
        )(x, wt, params)

    # ----- K-tiled path (large H): bound per-step weight VMEM to (tk, H) -----
    k_fixed = _ktile_fixed_bytes(H, tk_sel, wb, pbufs)
    k_row = _ktile_row_bytes(H, tk_sel, xb, ob)
    tm_cap = max(8, (budget_eff - k_fixed) // k_row)
    tm_sel = tm if tm is not None else _choose_tm(M, tm_cap)
    est = k_fixed + tm_sel * k_row
    vmem_limit = int(min(budget, max(32 * 1024 * 1024, int(est * 1.2) + (2 << 20))))
    nk = H // tk_sel

    return pl.pallas_call(
        residual_block_ktiled_kernel,
        out_shape=jax.ShapeDtypeStruct((M, H), x.dtype),
        grid_spec=pltpu.PrefetchScalarGridSpec(
            num_scalar_prefetch=0,
            grid=(pl.cdiv(M, tm_sel), nk),
            in_specs=[
                pl.BlockSpec((tm_sel, tk_sel), lambda i, k: (i, k)),   # x K-slice (MXU lhs)
                pl.BlockSpec((tk_sel, H), lambda i, k: (k, 0)),        # streamed weight slice
                invariant((3, H), lambda i, k: (0, 0)),                # packed params
                pl.BlockSpec((tm_sel, H), lambda i, k: (i, 0)),        # full x row (residual)
            ],
            out_specs=pl.BlockSpec((tm_sel, H), lambda i, k: (i, 0)),
            scratch_shapes=[pltpu.VMEM((tm_sel, H), jnp.float32)],     # f32 accumulator
        ),
        compiler_params=pltpu.CompilerParams(
            dimension_semantics=("parallel", "arbitrary"),
            vmem_limit_bytes=vmem_limit,
        ),
    )(x, wt, params, x)


def residual_block(x, wt, params, *, tm=None, tk=None, force_ktile=False):
    """ResidualBlock forward. x: [..., H]; wt/params from prepare_residual_block_params."""
    orig_shape = x.shape
    H = orig_shape[-1]
    x2 = x.reshape(-1, H)
    try:
        out = _residual_block_2d(
            x2, wt, params,
            single_buffer=_HAS_PIPELINE_MODE, force_ktile=force_ktile, tm=tm, tk=tk)
    except Exception:
        if not _HAS_PIPELINE_MODE:
            raise
        # Fallback: default double-buffering if Buffered(1) is rejected by this jax/libtpu.
        out = _residual_block_2d(
            x2, wt, params,
            single_buffer=False, force_ktile=force_ktile, tm=tm, tk=tk)
    return out.reshape(orig_shape)


def residual_block_ref(x, weight, bias, gamma, beta):
    """Pure-JAX reference matching the PyTorch forward."""
    y = x @ weight.T + bias
    mean = jnp.mean(y, axis=-1, keepdims=True)
    var = jnp.mean((y - mean) ** 2, axis=-1, keepdims=True)
    y = (y - mean) / jnp.sqrt(var + LN_EPS)
    y = y * gamma + beta
    y = jnp.maximum(y, 0.0)
    return jnp.maximum(x + y, 0.0)


# --------------------------------------------------------------------------- #
# Demo / self-test
# --------------------------------------------------------------------------- #
if __name__ == "__main__":
    key = jax.random.PRNGKey(0)

    def make_case(k, m, h):
        k1, k2, k3, k4, k5 = jax.random.split(k, 5)
        bound = 1.0 / (h ** 0.5)
        x = jax.random.normal(k1, (m, h), jnp.float32)
        weight = jax.random.uniform(k2, (h, h), jnp.float32, -bound, bound)
        bias = jax.random.uniform(k3, (h,), jnp.float32, -bound, bound)
        gamma = 1.0 + 0.1 * jax.random.normal(k4, (h,), jnp.float32)
        beta = 0.1 * jax.random.normal(k5, (h,), jnp.float32)
        return x, weight, bias, gamma, beta

    k1, k2 = jax.random.split(key)

    # Case 1: module-sized shapes (batch=8, hidden_dim=32) -> full-weight path.
    x, w, b, g, be = make_case(k1, 8, 32)
    wt, params = prepare_residual_block_params(w, b, g, be)   # one-time prep
    out = jax.block_until_ready(residual_block(x, wt, params))
    ref = residual_block_ref(x, w, b, g, be)
    assert out.shape == x.shape
    assert jnp.allclose(out, ref, atol=2e-4, rtol=2e-4), "full-weight path mismatch"

    # Case 2: exercise the K-tiled (streamed-weight) accumulator path at small scale.
    x2, w2, b2, g2, be2 = make_case(k2, 64, 512)
    wt2, params2 = prepare_residual_block_params(w2, b2, g2, be2)
    out2 = jax.block_until_ready(residual_block(x2, wt2, params2, force_ktile=True))
    ref2 = residual_block_ref(x2, w2, b2, g2, be2)
    assert out2.shape == x2.shape
    assert jnp.allclose(out2, ref2, atol=2e-4, rtol=2e-4), "K-tiled path mismatch"

    print("KERNEL_OK")
</pallas_src>

<mosaic_0001>
module attributes {stable_mosaic.version = 11 : i64} {
  func.func @residual_block_kernel(%arg0: i32, %arg1: memref<8x32xf32, #tpu.memory_space<vmem>>, %arg2: memref<32x32xf32, #tpu.memory_space<vmem>>, %arg3: memref<3x32xf32, #tpu.memory_space<vmem>>, %arg4: memref<8x32xf32, #tpu.memory_space<vmem>>) attributes {dimension_semantics = [#tpu.dimension_semantics<parallel>], iteration_bounds = array<i64: 1>, scalar_prefetch = 0 : i64, scratch_operands = 0 : i64, tpu.core_type = #tpu.core_type<tc>, window_params = [{transform_indices = @transform_0, window_bounds = array<i64: 8, 32>}, {pipeline_mode = #tpu.pipeline_mode<synchronous>, transform_indices = @transform_1, window_bounds = array<i64: 32, 32>}, {pipeline_mode = #tpu.pipeline_mode<synchronous>, transform_indices = @transform_2, window_bounds = array<i64: 3, 32>}, {transform_indices = @transform_3, window_bounds = array<i64: 8, 32>}]} {
    %c0 = arith.constant 0 : index
    %c0_0 = arith.constant 0 : index
    %0 = vector.load %arg1[%c0, %c0_0] : memref<8x32xf32, #tpu.memory_space<vmem>>, vector<8x32xf32>
    %c0_1 = arith.constant 0 : index
    %c0_2 = arith.constant 0 : index
    %1 = vector.load %arg2[%c0_1, %c0_2] : memref<32x32xf32, #tpu.memory_space<vmem>>, vector<32x32xf32>
    %cst = arith.constant dense<0.000000e+00> : vector<8x32xf32>
    %2 = tpu.matmul %0, %1, %cst {dimension_numbers = #tpu.dot_dimension_numbers<[1], [0], [0], [1], [0, 0, 1, 1], [], []>} : vector<8x32xf32>, vector<32x32xf32>, vector<8x32xf32> -> vector<8x32xf32>
    %c0_3 = arith.constant 0 : index
    %c0_4 = arith.constant 0 : index
    %3 = vector.load %arg3[%c0_3, %c0_4] : memref<3x32xf32, #tpu.memory_space<vmem>>, vector<3x32xf32>
    %4 = vector.extract_strided_slice %3 {offsets = [0, 0], sizes = [1, 32], strides = [1, 1]} : vector<3x32xf32> to vector<1x32xf32>
    %5 = vector.broadcast %4 : vector<1x32xf32> to vector<8x32xf32>
    %6 = arith.addf %2, %5 : vector<8x32xf32>
    %cst_5 = arith.constant dense<0.000000e+00> : vector<8xf32>
    %7 = vector.multi_reduction <add>, %6, %cst_5 [1] : vector<8x32xf32> to vector<8xf32>
    %8 = vector.shape_cast %7 : vector<8xf32> to vector<8x1xf32>
    %cst_6 = arith.constant 3.200000e+01 : f32
    %9 = vector.broadcast %cst_6 : f32 to vector<8x1xf32>
    %10 = arith.divf %8, %9 : vector<8x1xf32>
    %11 = arith.mulf %6, %6 : vector<8x32xf32>
    %cst_7 = arith.constant dense<0.000000e+00> : vector<8xf32>
    %12 = vector.multi_reduction <add>, %11, %cst_7 [1] : vector<8x32xf32> to vector<8xf32>
    %13 = vector.shape_cast %12 : vector<8xf32> to vector<8x1xf32>
    %cst_8 = arith.constant 3.200000e+01 : f32
    %14 = vector.broadcast %cst_8 : f32 to vector<8x1xf32>
    %15 = arith.divf %13, %14 : vector<8x1xf32>
    %16 = arith.mulf %10, %10 : vector<8x1xf32>
    %17 = arith.subf %15, %16 : vector<8x1xf32>
    %18 = vector.broadcast %10 : vector<8x1xf32> to vector<8x32xf32>
    %19 = arith.subf %6, %18 : vector<8x32xf32>
    %cst_9 = arith.constant 9.99999974E-6 : f32
    %20 = vector.broadcast %cst_9 : f32 to vector<8x1xf32>
    %21 = arith.addf %17, %20 : vector<8x1xf32>
    %22 = math.rsqrt %21 : vector<8x1xf32>
    %23 = vector.broadcast %22 : vector<8x1xf32> to vector<8x32xf32>
    %24 = arith.mulf %19, %23 : vector<8x32xf32>
    %25 = vector.extract_strided_slice %3 {offsets = [1, 0], sizes = [1, 32], strides = [1, 1]} : vector<3x32xf32> to vector<1x32xf32>
    %26 = vector.broadcast %25 : vector<1x32xf32> to vector<8x32xf32>
    %27 = arith.mulf %24, %26 : vector<8x32xf32>
    %28 = vector.extract_strided_slice %3 {offsets = [2, 0], sizes = [1, 32], strides = [1, 1]} : vector<3x32xf32> to vector<1x32xf32>
    %29 = vector.broadcast %28 : vector<1x32xf32> to vector<8x32xf32>
    %30 = arith.addf %27, %29 : vector<8x32xf32>
    %cst_10 = arith.constant 0.000000e+00 : f32
    %31 = vector.broadcast %cst_10 : f32 to vector<8x32xf32>
    %32 = arith.maximumf %30, %31 : vector<8x32xf32>
    %33 = arith.addf %0, %32 : vector<8x32xf32>
    %cst_11 = arith.constant 0.000000e+00 : f32
    %34 = vector.broadcast %cst_11 : f32 to vector<8x32xf32>
    %35 = arith.maximumf %33, %34 : vector<8x32xf32>
    %c0_12 = arith.constant 0 : index
    %c0_13 = arith.constant 0 : index
    %36 = vector.load %arg4[%c0_12, %c0_13] : memref<8x32xf32, #tpu.memory_space<vmem>>, vector<8x32xf32>
    tpu.vector_store %arg4[%c0_12, %c0_13], %35 {strides = array<i32>} : memref<8x32xf32, #tpu.memory_space<vmem>>, vector<8x32xf32>,
    return
  }
  func.func @transform_0(%arg0: i32) -> (i32, i32) {
    %c0_i32 = arith.constant 0 : i32
    %c0_i32_0 = arith.constant 0 : i32
    return %arg0, %c0_i32 : i32, i32
  }
  func.func @transform_1(%arg0: i32) -> (i32, i32) {
    %c0_i32 = arith.constant 0 : i32
    %c0_i32_0 = arith.constant 0 : i32
    %c0_i32_1 = arith.constant 0 : i32
    return %c0_i32, %c0_i32_0 : i32, i32
  }
  func.func @transform_2(%arg0: i32) -> (i32, i32) {
    %c0_i32 = arith.constant 0 : i32
    %c0_i32_0 = arith.constant 0 : i32
    %c0_i32_1 = arith.constant 0 : i32
    return %c0_i32, %c0_i32_0 : i32, i32
  }
  func.func @transform_3(%arg0: i32) -> (i32, i32) {
    %c0_i32 = arith.constant 0 : i32
    %c0_i32_0 = arith.constant 0 : i32
    return %arg0, %c0_i32 : i32, i32
  }
}

module attributes {stable_mosaic.version = 11 : i64} {
  func.func @residual_block_kernel(%arg0: i32, %arg1: memref<8x32xf32, #tpu.memory_space<vmem>>, %arg2: memref<32x32xf32, #tpu.memory_space<vmem>>, %arg3: memref<3x32xf32, #tpu.memory_space<vmem>>, %arg4: memref<8x32xf32, #tpu.memory_space<vmem>>) attributes {dimension_semantics = [#tpu.dimension_semantics<parallel>], iteration_bounds = array<i64: 1>, scalar_prefetch = 0 : i64, scratch_operands = 0 : i64, tpu.core_type = #tpu.core_type<tc>, window_params = [{transform_indices = @transform_0, window_bounds = array<i64: 8, 32>}, {pipeline_mode = #tpu.pipeline_mode<synchronous>, transform_indices = @transform_1, window_bounds = array<i64: 32, 32>}, {pipeline_mode = #tpu.pipeline_mode<synchronous>, transform_indices = @transform_2, window_bounds = array<i64: 3, 32>}, {transform_indices = @transform_3, window_bounds = array<i64: 8, 32>}]} {
    %c0 = arith.constant 0 : index
    %c0_0 = arith.constant 0 : index
    %0 = vector.load %arg1[%c0, %c0_0] : memref<8x32xf32, #tpu.memory_space<vmem>>, vector<8x32xf32>
    %c0_1 = arith.constant 0 : index
    %c0_2 = arith.constant 0 : index
    %1 = vector.load %arg2[%c0_1, %c0_2] : memref<32x32xf32, #tpu.memory_space<vmem>>, vector<32x32xf32>
    %cst = arith.constant dense<0.000000e+00> : vector<8x32xf32>
    %2 = tpu.matmul %0, %1, %cst {dimension_numbers = #tpu.dot_dimension_numbers<[1], [0], [0], [1], [0, 0, 1, 1], [], []>} : vector<8x32xf32>, vector<32x32xf32>, vector<8x32xf32> -> vector<8x32xf32>
    %c0_3 = arith.constant 0 : index
    %c0_4 = arith.constant 0 : index
    %3 = vector.load %arg3[%c0_3, %c0_4] : memref<3x32xf32, #tpu.memory_space<vmem>>, vector<3x32xf32>
    %4 = vector.extract_strided_slice %3 {offsets = [0, 0], sizes = [1, 32], strides = [1, 1]} : vector<3x32xf32> to vector<1x32xf32>
    %5 = vector.broadcast %4 : vector<1x32xf32> to vector<8x32xf32>
    %6 = arith.addf %2, %5 : vector<8x32xf32>
    %cst_5 = arith.constant dense<0.000000e+00> : vector<8xf32>
    %7 = vector.multi_reduction <add>, %6, %cst_5 [1] : vector<8x32xf32> to vector<8xf32>
    %8 = vector.shape_cast %7 : vector<8xf32> to vector<8x1xf32>
    %cst_6 = arith.constant 3.200000e+01 : f32
    %9 = vector.broadcast %cst_6 : f32 to vector<8x1xf32>
    %10 = arith.divf %8, %9 : vector<8x1xf32>
    %11 = arith.mulf %6, %6 : vector<8x32xf32>
    %cst_7 = arith.constant dense<0.000000e+00> : vector<8xf32>
    %12 = vector.multi_reduction <add>, %11, %cst_7 [1] : vector<8x32xf32> to vector<8xf32>
    %13 = vector.shape_cast %12 : vector<8xf32> to vector<8x1xf32>
    %cst_8 = arith.constant 3.200000e+01 : f32
    %14 = vector.broadcast %cst_8 : f32 to vector<8x1xf32>
    %15 = arith.divf %13, %14 : vector<8x1xf32>
    %16 = arith.mulf %10, %10 : vector<8x1xf32>
    %17 = arith.subf %15, %16 : vector<8x1xf32>
    %18 = vector.broadcast %10 : vector<8x1xf32> to vector<8x32xf32>
    %19 = arith.subf %6, %18 : vector<8x32xf32>
    %cst_9 = arith.constant 9.99999974E-6 : f32
    %20 = vector.broadcast %cst_9 : f32 to vector<8x1xf32>
    %21 = arith.addf %17, %20 : vector<8x1xf32>
    %22 = math.rsqrt %21 : vector<8x1xf32>
    %23 = vector.broadcast %22 : vector<8x1xf32> to vector<8x32xf32>
    %24 = arith.mulf %19, %23 : vector<8x32xf32>
    %25 = vector.extract_strided_slice %3 {offsets = [1, 0], sizes = [1, 32], strides = [1, 1]} : vector<3x32xf32> to vector<1x32xf32>
    %26 = vector.broadcast %25 : vector<1x32xf32> to vector<8x32xf32>
    %27 = arith.mulf %24, %26 : vector<8x32xf32>
    %28 = vector.extract_strided_slice %3 {offsets = [2, 0], sizes = [1, 32], strides = [1, 1]} : vector<3x32xf32> to vector<1x32xf32>
    %29 = vector.broadcast %28 : vector<1x32xf32> to vector<8x32xf32>
    %30 = arith.addf %27, %29 : vector<8x32xf32>
    %cst_10 = arith.constant 0.000000e+00 : f32
    %31 = vector.broadcast %cst_10 : f32 to vector<8x32xf32>
    %32 = arith.maximumf %30, %31 : vector<8x32xf32>
    %33 = arith.addf %0, %32 : vector<8x32xf32>
    %cst_11 = arith.constant 0.000000e+00 : f32
    %34 = vector.broadcast %cst_11 : f32 to vector<8x32xf32>
    %35 = arith.maximumf %33, %34 : vector<8x32xf32>
    %c0_12 = arith.constant 0 : index
    %c0_13 = arith.constant 0 : index
    %36 = vector.load %arg4[%c0_12, %c0_13] : memref<8x32xf32, #tpu.memory_space<vmem>>, vector<8x32xf32>
    tpu.vector_store %arg4[%c0_12, %c0_13], %35 {strides = array<i32>} : memref<8x32xf32, #tpu.memory_space<vmem>>, vector<8x32xf32>,
    return
  }
  func.func @transform_0(%arg0: i32) -> (i32, i32) {
    %c0_i32 = arith.constant 0 : i32
    %c0_i32_0 = arith.constant 0 : i32
    return %arg0, %c0_i32 : i32, i32
  }
  func.func @transform_1(%arg0: i32) -> (i32, i32) {
    %c0_i32 = arith.constant 0 : i32
    %c0_i32_0 = arith.constant 0 : i32
    %c0_i32_1 = arith.constant 0 : i32
    return %c0_i32, %c0_i32_0 : i32, i32
  }
  func.func @transform_2(%arg0: i32) -> (i32, i32) {
    %c0_i32 = arith.constant 0 : i32
    %c0_i32_0 = arith.constant 0 : i32
    %c0_i32_1 = arith.constant 0 : i32
    return %c0_i32, %c0_i32_0 : i32, i32
  }
  func.func @transform_3(%arg0: i32) -> (i32, i32) {
    %c0_i32 = arith.constant 0 : i32
    %c0_i32_0 = arith.constant 0 : i32
    return %arg0, %c0_i32 : i32, i32
  }
}

</mosaic_0001>

<llo_original>
// kernel: tpu_custom_call.1
$region0: #{tpu_custom_call.1}
  #allocation0 [shape = 'u32[]', space=smem, size = 0x4, offset = 0x4, fixed_abs, tag = 'smem constant byte address 0x4 - core index']
  #allocation1 [shape = 'u32[72,128]{1,0:T(1,128)}', space=vmem, size = 0x9000, scoped, tag = 'internal scratch']
  %s0 = inlined_call_operand.hbm [shape: f32[8,32], index: 0, kind: input, shape index: {}]
  %s1 = inlined_call_operand.hbm [shape: f32[32,32], index: 1, kind: input, shape index: {}]
  %s2 = inlined_call_operand.hbm [shape: f32[3,32], index: 2, kind: input, shape index: {}]
  %s3 = inlined_call_operand.hbm [shape: f32[8,32], index: 3, kind: output, shape index: {}]
  %s4 = sld [smem:[#allocation0]]
  $region34: #{tpu_custom_call.1} parent=0
    _
  %s6 = ssub.s32 1, %s4
  %s7 = scalar_select 0, %s6, %s4
  $region1: #{tpu_custom_call.1} parent=0
    #allocation2 [shape = 'u8[4096]{0}', space=vmem, size = 0x1000, scoped, tag = 'input window, operand 0, single buffered']
    #allocation3 [shape = 's32[1]{0}', space=sflag, size = 0x4, scoped, tag = 'scoped memory for tpu_custom_call.1']
    #allocation4 [shape = 's32[1]{0}', space=sflag, size = 0x4, scoped, tag = 'scoped memory for tpu_custom_call.1']
    #allocation5 [shape = 'u8[16384]{0}', space=vmem, size = 0x4000, scoped, tag = 'input window, operand 1, single buffered']
    #allocation6 [shape = 's32[1]{0}', space=sflag, size = 0x4, scoped, tag = 'scoped memory for tpu_custom_call.1']
    #allocation7 [shape = 'u8[2048]{0}', space=vmem, size = 0x800, scoped, tag = 'input window, operand 2, single buffered']
    #allocation8 [shape = 'u8[4096]{0}', space=vmem, size = 0x1000, scoped, tag = 'output window, operand 0, single buffered']
    %8 = vsyncpa [#allocation3], 0
    %9 = vsyncpa [#allocation6], 0
    %10 = vsyncpa [#allocation4], 0
    // Predicated region
    $region2: #{tpu_custom_call.1} parent=1 // pred_check
      _
    $region3: #{tpu_custom_call.1} parent=1 // pred_check_branch
      %12 = sbr.rel (0) target = $region5
    $region4: #{tpu_custom_call.1} parent=1 // pred_region
      %14 = vsyncadd [#allocation3], 0
      %s16 = sshll.u32 %s0, 4
      %s17 = int_to_ptr.hbm [resolvable:$true] %s16
      %s18 = sshll.u32 [#allocation2], 4
      %s19 = int_to_ptr.vmem [resolvable:$true] %s18
      %21 = dma.hbm_to_vmem [thread:$0]  %s17, 128, %s19, [#allocation3]
    $region5: #{tpu_custom_call.1} parent=1 // pred_fallthru
      _
    // Predicated region
    $region6: #{tpu_custom_call.1} parent=1 // pred_check
      _
    $region7: #{tpu_custom_call.1} parent=1 // pred_check_branch
      %23 = sbr.rel (0) target = $region9
    $region8: #{tpu_custom_call.1} parent=1 // pred_region
      %25 = vsyncadd [#allocation6], 0
      %s26 = sshll.u32 %s1, 4
      %s27 = int_to_ptr.hbm [resolvable:$true] %s26
      %s28 = sshll.u32 [#allocation5], 4
      %s29 = int_to_ptr.vmem [resolvable:$true] %s28
      %34 = dma.hbm_to_vmem [thread:$0]  %s27, 512, %s29, [#allocation6], 128, 128, 8
    $region9: #{tpu_custom_call.1} parent=1 // pred_fallthru
      _
    // Predicated region
    $region10: #{tpu_custom_call.1} parent=1 // pred_check
      _
    $region11: #{tpu_custom_call.1} parent=1 // pred_check_branch
      %36 = sbr.rel (0) target = $region13
    $region12: #{tpu_custom_call.1} parent=1 // pred_region
      %38 = vsyncadd [#allocation6], 0
      %s40 = sshll.u32 %s2, 4
      %s41 = int_to_ptr.hbm [resolvable:$true] %s40
      %s42 = sshll.u32 [#allocation7], 4
      %s43 = int_to_ptr.vmem [resolvable:$true] %s42
      %45 = dma.hbm_to_vmem [thread:$0]  %s41, 64, %s43, [#allocation6]
    $region13: #{tpu_custom_call.1} parent=1 // pred_fallthru
      _
    // Predicated region
    $region14: #{tpu_custom_call.1} parent=1 // pred_check
      _
    $region15: #{tpu_custom_call.1} parent=1 // pred_check_branch
      %47 = sbr.rel (0) target = $region17
    $region16: #{tpu_custom_call.1} parent=1 // pred_region
      %49 = dma.done [#allocation3], 128
    $region17: #{tpu_custom_call.1} parent=1 // pred_fallthru
      _
    // Predicated region
    $region18: #{tpu_custom_call.1} parent=1 // pred_check
      _
    $region19: #{tpu_custom_call.1} parent=1 // pred_check_branch
      %51 = sbr.rel (0) target = $region21
    $region20: #{tpu_custom_call.1} parent=1 // pred_region
      %53 = dma.done [#allocation6], 512
    $region21: #{tpu_custom_call.1} parent=1 // pred_fallthru
      _
    // Predicated region
    $region22: #{tpu_custom_call.1} parent=1 // pred_check
      _
    $region23: #{tpu_custom_call.1} parent=1 // pred_check_branch
      %55 = sbr.rel (0) target = $region25
    $region24: #{tpu_custom_call.1} parent=1 // pred_region
      %57 = dma.done [#allocation6], 64
    $region25: #{tpu_custom_call.1} parent=1 // pred_fallthru
      _
    %v58 = vld [vmem:[#allocation2] sm:$0xff]
    %v59 = vld [vmem:[#allocation5] sm:$0xff]
    %v60 = vld [vmem:[#allocation5 + $0x8] sm:$0xff]
    %v61 = vld [vmem:[#allocation5 + $0x10] sm:$0xff]
    %v62 = vld [vmem:[#allocation5 + $0x18] sm:$0xff]
    %v63 = vld [vmem:[#allocation7] sm:$0x7]
    %v64 = vperm.slane %v63, 0
    %vm65 = vcmask 261120
    %v67 = vsel %vm65, %v58, 0
    %69 = vmatpush.msra.mxu0 0.0
    %70 = vmatpush.msra.mxu0 0.0
    %71 = vmatpush.msra.mxu0 0.0
    %72 = vmatpush.msra.mxu0 0.0
    %73 = vmatpush.msra.mxu0 0.0
    %74 = vmatpush.msra.mxu0 0.0
    %75 = vmatpush.msra.mxu0 0.0
    %76 = vmatpush.msra.mxu0 0.0
    %77 = vmatpush.msra.mxu0 0.0
    %78 = vmatpush.msra.mxu0 0.0
    %79 = vmatpush.msra.mxu0 0.0
    %80 = vmatpush.msra.mxu0 0.0
    %81 = vmatpush.msra.mxu0 %v62
    %82 = vmatpush.msra.mxu0 %v61
    %83 = vmatpush.msra.mxu0 %v60
    %84 = vmatpush.msra.mxu0 %v59
    %85 = vmatmul.f32.gmra.mxu0 %v67
    %v86 = vpop.f32.mrf.mxu0
    %v87 = vadd.f32 %v64, %v86
    %88 = vdwg.mxu0
    %v89 = vsel %vm65, %v87, 0.0
    %90 = vadd.xlane.f32.xlu0 %v89
    %v91 = vpop.xlane.xlu0 %90
    %v92 = vrcp.pop 32.0
    %v93 = vmul.f32 32.0, %v92
    %v94 = vsub.f32 1.0, %v93
    %v95 = vmul.f32 %v92, %v94
    %v96 = vadd.f32 %v92, %v95
    %vm97 = vweird.f32 %v92
    %v98 = vsel %vm97, %v92, %v96
    %v99 = vmul.f32 %v91, %v98
    %v100 = vmul.f32 %v87, %v87
    %v101 = vsel %vm65, %v100, 0.0
    %102 = vadd.xlane.f32.xlu0 %v101
    %v103 = vpop.xlane.xlu0 %102
    %v104 = vmul.f32 %v103, %v98
    %v105 = vmul.f32 %v99, %v99
    %v106 = vsub.f32 %v104, %v105
    %v107 = vsub.f32 %v87, %v99
    %v108 = vadd.f32 %v106, 1e-05
    %v109 = vrsqrt.pop %v108
    %v110 = vmul.f32 %v109, %v108
    %v111 = vmul.f32 %v110, %v109
    %v112 = vmul.f32 0.5, %v111
    %v113 = vsub.f32 1.5, %v112
    %v114 = vmul.f32 %v109, %v113
    %vm115 = vweird.f32 %v108
    %vm116 = vweird.f32 %v109
    %vm117 = vmor %vm115, %vm116
    %v118 = vsel %vm117, %v109, %v114
    %v119 = vmul.f32 %v107, %v118
    %v120 = vperm.slane %v63, 1
    %v121 = vmul.f32 %v119, %v120
    %v122 = vperm.slane %v63, 2
    %v123 = vadd.f32 %v121, %v122
    %v124 = vmax.f32 %v123, 0.0
    %v125 = vadd.f32 %v58, %v124
    %v126 = vmax.f32 %v125, 0.0
    %127 = vst.msk [vmem:[#allocation8] sm:$0xff] %vm65, %v126
    // Predicated region
    $region26: #{tpu_custom_call.1} parent=1 // pred_check
      _
    $region27: #{tpu_custom_call.1} parent=1 // pred_check_branch
      %129 = sbr.rel (0) target = $region29
    $region28: #{tpu_custom_call.1} parent=1 // pred_region
      %131 = vsyncadd [#allocation4], 0
      %s133 = sshll.u32 [#allocation8], 4
      %s134 = int_to_ptr.vmem [resolvable:$true] %s133
      %s135 = sshll.u32 %s3, 4
      %s136 = int_to_ptr.hbm [resolvable:$true] %s135
      %138 = dma.vmem_to_hbm [thread:$0]  %s134, 128, %s136, [#allocation4]
    $region29: #{tpu_custom_call.1} parent=1 // pred_fallthru
      _
    // Predicated region
    $region30: #{tpu_custom_call.1} parent=1 // pred_check
      _
    $region31: #{tpu_custom_call.1} parent=1 // pred_check_branch
      %140 = sbr.rel (0) target = $region33
    $region32: #{tpu_custom_call.1} parent=1 // pred_region
      %142 = dma.done [#allocation4], 128
    $region33: #{tpu_custom_call.1} parent=1 // pred_fallthru
      _
    %143 = vsyncpa [#allocation3], 1
    %144 = vsyncpa [#allocation6], 1
    %145 = vsyncpa [#allocation4], 1

// kernel: tpu_custom_call.1
$region0: #{tpu_custom_call.1}
  #allocation0 [shape = 'u32[]', space=smem, size = 0x4, offset = 0x4, fixed_abs, tag = 'smem constant byte address 0x4 - core index']
  #allocation1 [shape = 'u32[72,128]{1,0:T(1,128)}', space=vmem, size = 0x9000, scoped, tag = 'internal scratch']
  %s0 = inlined_call_operand.hbm [shape: f32[8,32], index: 0, kind: input, shape index: {}]
  %s1 = inlined_call_operand.hbm [shape: f32[32,32], index: 1, kind: input, shape index: {}]
  %s2 = inlined_call_operand.hbm [shape: f32[3,32], index: 2, kind: input, shape index: {}]
  %s3 = inlined_call_operand.hbm [shape: f32[8,32], index: 3, kind: output, shape index: {}]
  %s4 = sld [smem:[#allocation0]]
  $region34: #{tpu_custom_call.1} parent=0
    _
  %s6 = ssub.s32 1, %s4
  %s7 = scalar_select 0, %s6, %s4
  $region1: #{tpu_custom_call.1} parent=0
    #allocation2 [shape = 'u8[4096]{0}', space=vmem, size = 0x1000, scoped, tag = 'input window, operand 0, single buffered']
    #allocation3 [shape = 's32[1]{0}', space=sflag, size = 0x4, scoped, tag = 'scoped memory for tpu_custom_call.1']
    #allocation4 [shape = 's32[1]{0}', space=sflag, size = 0x4, scoped, tag = 'scoped memory for tpu_custom_call.1']
    #allocation5 [shape = 'u8[16384]{0}', space=vmem, size = 0x4000, scoped, tag = 'input window, operand 1, single buffered']
    #allocation6 [shape = 's32[1]{0}', space=sflag, size = 0x4, scoped, tag = 'scoped memory for tpu_custom_call.1']
    #allocation7 [shape = 'u8[2048]{0}', space=vmem, size = 0x800, scoped, tag = 'input window, operand 2, single buffered']
    #allocation8 [shape = 'u8[4096]{0}', space=vmem, size = 0x1000, scoped, tag = 'output window, operand 0, single buffered']
    %8 = vsyncpa [#allocation3], 0
    %9 = vsyncpa [#allocation6], 0
    %10 = vsyncpa [#allocation4], 0
    // Predicated region
    $region2: #{tpu_custom_call.1} parent=1 // pred_check
      _
    $region3: #{tpu_custom_call.1} parent=1 // pred_check_branch
      %12 = sbr.rel (0) target = $region5
    $region4: #{tpu_custom_call.1} parent=1 // pred_region
      %14 = vsyncadd [#allocation3], 0
      %s16 = sshll.u32 %s0, 4
      %s17 = int_to_ptr.hbm [resolvable:$true] %s16
      %s18 = sshll.u32 [#allocation2], 4
      %s19 = int_to_ptr.vmem [resolvable:$true] %s18
      %21 = dma.hbm_to_vmem [thread:$0]  %s17, 128, %s19, [#allocation3]
    $region5: #{tpu_custom_call.1} parent=1 // pred_fallthru
      _
    // Predicated region
    $region6: #{tpu_custom_call.1} parent=1 // pred_check
      _
    $region7: #{tpu_custom_call.1} parent=1 // pred_check_branch
      %23 = sbr.rel (0) target = $region9
    $region8: #{tpu_custom_call.1} parent=1 // pred_region
      %25 = vsyncadd [#allocation6], 0
      %s26 = sshll.u32 %s1, 4
      %s27 = int_to_ptr.hbm [resolvable:$true] %s26
      %s28 = sshll.u32 [#allocation5], 4
      %s29 = int_to_ptr.vmem [resolvable:$true] %s28
      %34 = dma.hbm_to_vmem [thread:$0]  %s27, 512, %s29, [#allocation6], 128, 128, 8
    $region9: #{tpu_custom_call.1} parent=1 // pred_fallthru
      _
    // Predicated region
    $region10: #{tpu_custom_call.1} parent=1 // pred_check
      _
    $region11: #{tpu_custom_call.1} parent=1 // pred_check_branch
      %36 = sbr.rel (0) target = $region13
    $region12: #{tpu_custom_call.1} parent=1 // pred_region
      %38 = vsyncadd [#allocation6], 0
      %s40 = sshll.u32 %s2, 4
      %s41 = int_to_ptr.hbm [resolvable:$true] %s40
      %s42 = sshll.u32 [#allocation7], 4
      %s43 = int_to_ptr.vmem [resolvable:$true] %s42
      %45 = dma.hbm_to_vmem [thread:$0]  %s41, 64, %s43, [#allocation6]
    $region13: #{tpu_custom_call.1} parent=1 // pred_fallthru
      _
    // Predicated region
    $region14: #{tpu_custom_call.1} parent=1 // pred_check
      _
    $region15: #{tpu_custom_call.1} parent=1 // pred_check_branch
      %47 = sbr.rel (0) target = $region17
    $region16: #{tpu_custom_call.1} parent=1 // pred_region
      %49 = dma.done [#allocation3], 128
    $region17: #{tpu_custom_call.1} parent=1 // pred_fallthru
      _
    // Predicated region
    $region18: #{tpu_custom_call.1} parent=1 // pred_check
      _
    $region19: #{tpu_custom_call.1} parent=1 // pred_check_branch
      %51 = sbr.rel (0) target = $region21
    $region20: #{tpu_custom_call.1} parent=1 // pred_region
      %53 = dma.done [#allocation6], 512
    $region21: #{tpu_custom_call.1} parent=1 // pred_fallthru
      _
    // Predicated region
    $region22: #{tpu_custom_call.1} parent=1 // pred_check
      _
    $region23: #{tpu_custom_call.1} parent=1 // pred_check_branch
      %55 = sbr.rel (0) target = $region25
    $region24: #{tpu_custom_call.1} parent=1 // pred_region
      %57 = dma.done [#allocation6], 64
    $region25: #{tpu_custom_call.1} parent=1 // pred_fallthru
      _
    %v58 = vld [vmem:[#allocation2] sm:$0xff]
    %v59 = vld [vmem:[#allocation5] sm:$0xff]
    %v60 = vld [vmem:[#allocation5 + $0x8] sm:$0xff]
    %v61 = vld [vmem:[#allocation5 + $0x10] sm:$0xff]
    %v62 = vld [vmem:[#allocation5 + $0x18] sm:$0xff]
    %v63 = vld [vmem:[#allocation7] sm:$0x7]
    %v64 = vperm.slane %v63, 0
    %vm65 = vcmask 261120
    %v67 = vsel %vm65, %v58, 0
    %69 = vmatpush.msra.mxu0 0.0
    %70 = vmatpush.msra.mxu0 0.0
    %71 = vmatpush.msra.mxu0 0.0
    %72 = vmatpush.msra.mxu0 0.0
    %73 = vmatpush.msra.mxu0 0.0
    %74 = vmatpush.msra.mxu0 0.0
    %75 = vmatpush.msra.mxu0 0.0
    %76 = vmatpush.msra.mxu0 0.0
    %77 = vmatpush.msra.mxu0 0.0
    %78 = vmatpush.msra.mxu0 0.0
    %79 = vmatpush.msra.mxu0 0.0
    %80 = vmatpush.msra.mxu0 0.0
    %81 = vmatpush.msra.mxu0 %v62
    %82 = vmatpush.msra.mxu0 %v61
    %83 = vmatpush.msra.mxu0 %v60
    %84 = vmatpush.msra.mxu0 %v59
    %85 = vmatmul.f32.gmra.mxu0 %v67
    %v86 = vpop.f32.mrf.mxu0
    %v87 = vadd.f32 %v64, %v86
    %88 = vdwg.mxu0
    %v89 = vsel %vm65, %v87, 0.0
    %90 = vadd.xlane.f32.xlu0 %v89
    %v91 = vpop.xlane.xlu0 %90
    %v92 = vrcp.pop 32.0
    %v93 = vmul.f32 32.0, %v92
    %v94 = vsub.f32 1.0, %v93
    %v95 = vmul.f32 %v92, %v94
    %v96 = vadd.f32 %v92, %v95
    %vm97 = vweird.f32 %v92
    %v98 = vsel %vm97, %v92, %v96
    %v99 = vmul.f32 %v91, %v98
    %v100 = vmul.f32 %v87, %v87
    %v101 = vsel %vm65, %v100, 0.0
    %102 = vadd.xlane.f32.xlu0 %v101
    %v103 = vpop.xlane.xlu0 %102
    %v104 = vmul.f32 %v103, %v98
    %v105 = vmul.f32 %v99, %v99
    %v106 = vsub.f32 %v104, %v105
    %v107 = vsub.f32 %v87, %v99
    %v108 = vadd.f32 %v106, 1e-05
    %v109 = vrsqrt.pop %v108
    %v110 = vmul.f32 %v109, %v108
    %v111 = vmul.f32 %v110, %v109
    %v112 = vmul.f32 0.5, %v111
    %v113 = vsub.f32 1.5, %v112
    %v114 = vmul.f32 %v109, %v113
    %vm115 = vweird.f32 %v108
    %vm116 = vweird.f32 %v109
    %vm117 = vmor %vm115, %vm116
    %v118 = vsel %vm117, %v109, %v114
    %v119 = vmul.f32 %v107, %v118
    %v120 = vperm.slane %v63, 1
    %v121 = vmul.f32 %v119, %v120
    %v122 = vperm.slane %v63, 2
    %v123 = vadd.f32 %v121, %v122
    %v124 = vmax.f32 %v123, 0.0
    %v125 = vadd.f32 %v58, %v124
    %v126 = vmax.f32 %v125, 0.0
    %127 = vst.msk [vmem:[#allocation8] sm:$0xff] %vm65, %v126
    // Predicated region
    $region26: #{tpu_custom_call.1} parent=1 // pred_check
      _
    $region27: #{tpu_custom_call.1} parent=1 // pred_check_branch
      %129 = sbr.rel (0) target = $region29
    $region28: #{tpu_custom_call.1} parent=1 // pred_region
      %131 = vsyncadd [#allocation4], 0
      %s133 = sshll.u32 [#allocation8], 4
      %s134 = int_to_ptr.vmem [resolvable:$true] %s133
      %s135 = sshll.u32 %s3, 4
      %s136 = int_to_ptr.hbm [resolvable:$true] %s135
      %138 = dma.vmem_to_hbm [thread:$0]  %s134, 128, %s136, [#allocation4]
    $region29: #{tpu_custom_call.1} parent=1 // pred_fallthru
      _
    // Predicated region
    $region30: #{tpu_custom_call.1} parent=1 // pred_check
      _
    $region31: #{tpu_custom_call.1} parent=1 // pred_check_branch
      %140 = sbr.rel (0) target = $region33
    $region32: #{tpu_custom_call.1} parent=1 // pred_region
      %142 = dma.done [#allocation4], 128
    $region33: #{tpu_custom_call.1} parent=1 // pred_fallthru
      _
    %143 = vsyncpa [#allocation3], 1
    %144 = vsyncpa [#allocation6], 1
    %145 = vsyncpa [#allocation4], 1

</llo_original>
